<compile_context>
chip_gen: v7x
topology: tpu7x:2x2x1
jax: 0.10.0
libtpu: 0.0.40
codegen_flags: <defaults>
</compile_context>

<pallas_src>
import jax
import jax.numpy as jnp
from jax import lax
from jax.experimental import pallas as pl
from jax.experimental.pallas import tpu as pltpu   # noqa: F401  (TPU backend)


def _make_cnn_kernel(B, T, max_fs, n_heads, out_dim, out_w):
    """Fused CNNSentiment forward kernel (single invocation, all data in VMEM)."""
    BT = B * T

    def kernel(ids_ref, emb_ref, wtap_ref, scale_ref, shift_ref, mask_ref,
               wh_ref, bh_ref, out_ref):
        # ---- embedding lookup as a one-hot matmul (fused gather) ----
        ids = ids_ref[...]                                        # (BT+max_fs-1, 1) i32
        vocab = emb_ref.shape[0]
        iota = lax.broadcasted_iota(jnp.int32, (ids.shape[0], vocab), 1)
        onehot = (ids == iota).astype(jnp.float32)                # (Rp, VOCAB)
        x_stack = jnp.dot(onehot, emb_ref[...],
                          preferred_element_type=jnp.float32)     # (Rp, E)

        # ---- conv: one matmul per tap, fused over batch & filter-size groups ----
        acc = jnp.dot(x_stack[0:BT, :], wtap_ref[0],
                      preferred_element_type=jnp.float32)         # (B*T, nfs*F)
        for k in range(1, max_fs):
            acc = acc + jnp.dot(x_stack[k:k + BT, :], wtap_ref[k],
                                preferred_element_type=jnp.float32)

        # folded BN(eval)+bias affine, ReLU; mask partial-window / cross-batch
        # rows to 0 BEFORE the max (ReLU output >= 0, so 0-masking is exact).
        y = jnp.maximum(acc * scale_ref[...] + shift_ref[...], 0.0) * mask_ref[...]

        # ---- temporal max-pool per batch; `cat` stays in registers ----
        pooled = [jnp.max(y[b * T:(b + 1) * T, :], axis=0, keepdims=True)
                  for b in range(B)]
        cat = jnp.concatenate(pooled, axis=0)                     # (B, nfs*F)
        # TODO(synk): dropout is identity at inference (eval mode); no mask applied.

        # ---- all 20 heads in ONE matmul (fc1∘fc2 composed on the host) ----
        logits = jnp.dot(cat, wh_ref[...],
                         preferred_element_type=jnp.float32) + bh_ref[...]  # (B, out_w)

        # ---- log_softmax vectorized across all heads (class-major columns) ----
        slabs = [logits[:, c * n_heads:(c + 1) * n_heads] for c in range(out_dim)]
        m = slabs[0]
        for c in range(1, out_dim):
            m = jnp.maximum(m, slabs[c])
        ssum = jnp.exp(slabs[0] - m)
        for c in range(1, out_dim):
            ssum = ssum + jnp.exp(slabs[c] - m)
        lse = m + jnp.log(ssum)
        pieces = [slabs[c] - lse for c in range(out_dim)]
        pad = out_w - out_dim * n_heads
        if pad > 0:
            pieces.append(jnp.zeros((B, pad), jnp.float32))
        out_ref[...] = jnp.concatenate(pieces, axis=1)            # one lane-dense store

    return kernel


def cnn_sentiment_forward(x_ids, params, filter_sizes, n_heads):
    """Full CNNSentiment.forward (eval mode).

    x_ids: (B, T) int32 token ids.  Returns (n_heads, B, output_dim) log-probs.
    """
    eps = 1e-5
    hp = jax.lax.Precision.HIGHEST
    table = params["emb"].astype(jnp.float32)                     # (VOCAB, E)
    _, E = table.shape
    B, T = x_ids.shape
    F = params["conv_w"][0].shape[0]                              # n_filters
    nfs = len(filter_sizes)
    C = nfs * F                                                   # F_total
    max_fs = max(filter_sizes)
    O = params["w2"].shape[1]                                     # output_dim
    NH = n_heads
    OUT_W = ((O * NH + 127) // 128) * 128                         # lane-dense out width
    BT = B * T
    Rp = BT + max_fs - 1

    # ---- one-time input/weight layout transforms (hoisted out of the kernel) ----
    # token ids, batch-major flattened + (max_fs-1) padding ids; their contribution
    # only ever lands in rows that are masked before the max-pool.
    ids_pad = jnp.concatenate(
        [x_ids.reshape(BT).astype(jnp.int32),
         jnp.zeros((max_fs - 1,), jnp.int32)]).reshape(Rp, 1)

    # per-tap conv weights fused over groups: (max_fs, E, nfs*F), zero columns for
    # taps beyond a group's filter size.  BN(eval)+bias folded to scale/shift.
    wtap = jnp.zeros((max_fs, E, C), jnp.float32)
    scales, shifts = [], []
    for i, fs in enumerate(filter_sizes):
        w = params["conv_w"][i][:, 0, :, :].astype(jnp.float32)   # (F, fs, E)
        for k in range(fs):
            wtap = wtap.at[k, :, i * F:(i + 1) * F].set(jnp.transpose(w[:, k, :]))
        inv = params["bn_gamma"][i] / jnp.sqrt(params["bn_var"][i] + eps)
        scales.append(inv)
        shifts.append((params["conv_b"][i] - params["bn_mean"][i]) * inv
                      + params["bn_beta"][i])
    scale_all = jnp.concatenate(scales).reshape(1, C).astype(jnp.float32)
    shift_all = jnp.concatenate(shifts).reshape(1, C).astype(jnp.float32)

    # validity mask (B*T, nfs*F): within-batch position t valid for group i iff
    # t <= T - fs_i (the whole conv window stays inside the same sequence).
    t_idx = jnp.tile(jnp.arange(T, dtype=jnp.int32), (B,)).reshape(BT, 1)
    limits = jnp.concatenate(
        [jnp.full((F,), T - fs + 1, jnp.int32) for fs in filter_sizes]).reshape(1, C)
    mask_all = (t_idx < limits).astype(jnp.float32)

    # heads: fc1 and fc2 are back-to-back Linears with no activation -> compose.
    # Column layout is class-major (col = c*NH + n) so log_softmax vectorizes.
    w1t = jnp.transpose(params["w1"], (0, 2, 1)).astype(jnp.float32)   # (NH, C, H)
    w2t = jnp.transpose(params["w2"], (0, 2, 1)).astype(jnp.float32)   # (NH, H, O)
    w_eff = jnp.einsum("nch,nho->nco", w1t, w2t, precision=hp)         # (NH, C, O)
    b_eff = (jnp.einsum("nh,nho->no", params["b1"].astype(jnp.float32), w2t,
                        precision=hp) + params["b2"])                  # (NH, O)
    w_heads = jnp.transpose(w_eff, (1, 2, 0)).reshape(C, O * NH)
    b_heads = jnp.transpose(b_eff, (1, 0)).reshape(1, O * NH)
    w_heads = jnp.pad(w_heads, ((0, 0), (0, OUT_W - O * NH))).astype(jnp.float32)
    b_heads = jnp.pad(b_heads, ((0, 0), (0, OUT_W - O * NH))).astype(jnp.float32)

    kernel = _make_cnn_kernel(B, T, max_fs, NH, O, OUT_W)

    # Single invocation; every operand is whole-array resident in VMEM.
    out_pad = pl.pallas_call(
        kernel,
        out_shape=jax.ShapeDtypeStruct((B, OUT_W), jnp.float32),
    )(ids_pad, table, wtap, scale_all, shift_all, mask_all, w_heads, b_heads)

    # (B, OUT_W) class-major -> (n_heads, B, O)
    out = out_pad[:, :O * NH].reshape(B, O, NH)
    return jnp.transpose(out, (2, 0, 1))


# ------------------------- pure-JAX reference (for validation) -------------------------
def _reference_forward(x_ids, params, filter_sizes, n_heads):
    eps = 1e-5
    emb = jnp.take(params["emb"], x_ids, axis=0)        # (B, T, E)
    xin = emb[:, None, :, :]                            # (B, 1, T, E)
    pooled = []
    for i, fs in enumerate(filter_sizes):
        conv = jax.lax.conv_general_dilated(
            xin, params["conv_w"][i], window_strides=(1, 1), padding="VALID",
            dimension_numbers=("NCHW", "OIHW", "NCHW"),
            precision=jax.lax.Precision.HIGHEST)        # (B, F, L, 1)
        conv = conv[..., 0] + params["conv_b"][i][None, :, None]
        inv = params["bn_gamma"][i] / jnp.sqrt(params["bn_var"][i] + eps)
        bn = ((conv - params["bn_mean"][i][None, :, None]) * inv[None, :, None]
              + params["bn_beta"][i][None, :, None])
        act = jnp.maximum(bn, 0.0)
        pooled.append(jnp.max(act, axis=2))             # (B, F)
    cat = jnp.concatenate(pooled, axis=1)               # dropout = identity (eval)
    outs = []
    for n in range(n_heads):
        h1 = jnp.dot(cat, params["w1"][n].T,
                     precision=jax.lax.Precision.HIGHEST) + params["b1"][n]
        h2 = jnp.dot(h1, params["w2"][n].T,
                     precision=jax.lax.Precision.HIGHEST) + params["b2"][n]
        outs.append(h2)
    logits = jnp.stack(outs, axis=0)                    # (n_heads, B, O)
    return jax.nn.log_softmax(logits, axis=-1)


if __name__ == "__main__":
    # Small shapes consistent with the module.
    VOCAB, E = 50, 32          # vocab_size, embedding_dim
    F = 4                      # n_filters
    FILTER_SIZES = (3, 4, 5)
    O = 2                      # output_dim
    HDIM = 100                 # self.hdim
    N_HEADS = 20               # len(fcs1) == len(fcs2) == 20
    B, T = 2, 16               # batch, sequence length (>= max filter size)

    key = jax.random.PRNGKey(0)
    keys = jax.random.split(key, 32)
    _ki = iter(range(32))

    def nxt():
        return keys[next(_ki)]

    params = {
        "emb": jax.random.normal(nxt(), (VOCAB, E), jnp.float32),
        "conv_w": [], "conv_b": [],
        "bn_gamma": [], "bn_beta": [], "bn_mean": [], "bn_var": [],
    }
    for fs in FILTER_SIZES:
        bound = 1.0 / jnp.sqrt(jnp.float32(fs * E))
        params["conv_w"].append(
            jax.random.uniform(nxt(), (F, 1, fs, E), jnp.float32, -bound, bound))
        params["conv_b"].append(
            jax.random.uniform(nxt(), (F,), jnp.float32, -bound, bound))
        params["bn_gamma"].append(
            jax.random.uniform(nxt(), (F,), jnp.float32, 0.5, 1.5))
        params["bn_beta"].append(0.1 * jax.random.normal(nxt(), (F,), jnp.float32))
        params["bn_mean"].append(0.1 * jax.random.normal(nxt(), (F,), jnp.float32))
        params["bn_var"].append(
            jax.random.uniform(nxt(), (F,), jnp.float32, 0.5, 1.5))

    F_TOTAL = len(FILTER_SIZES) * F
    b1_bound = 1.0 / jnp.sqrt(jnp.float32(F_TOTAL))
    params["w1"] = jax.random.uniform(nxt(), (N_HEADS, HDIM, F_TOTAL), jnp.float32,
                                      -b1_bound, b1_bound)
    params["b1"] = jax.random.uniform(nxt(), (N_HEADS, HDIM), jnp.float32,
                                      -b1_bound, b1_bound)
    b2_bound = 1.0 / jnp.sqrt(jnp.float32(HDIM))
    params["w2"] = jax.random.uniform(nxt(), (N_HEADS, O, HDIM), jnp.float32,
                                      -b2_bound, b2_bound)
    params["b2"] = jax.random.uniform(nxt(), (N_HEADS, O), jnp.float32,
                                      -b2_bound, b2_bound)

    x_ids = jax.random.randint(nxt(), (B, T), 0, VOCAB, dtype=jnp.int32)

    out = cnn_sentiment_forward(x_ids, params, FILTER_SIZES, N_HEADS)
    out = jax.block_until_ready(out)

    ref = _reference_forward(x_ids, params, FILTER_SIZES, N_HEADS)
    ref = jax.block_until_ready(ref)

    assert out.shape == (N_HEADS, B, O), out.shape
    max_err = float(jnp.max(jnp.abs(out - ref)))
    assert jnp.allclose(out, ref, atol=1e-4, rtol=1e-4), f"max abs err {max_err}"
    print("KERNEL_OK")
</pallas_src>

<mosaic_0001>
module attributes {stable_mosaic.version = 11 : i64} {
  func.func @kernel(%arg0: memref<36x1xi32, #tpu.memory_space<vmem>>, %arg1: memref<50x32xf32, #tpu.memory_space<vmem>>, %arg2: memref<5x32x12xf32, #tpu.memory_space<vmem>>, %arg3: memref<1x12xf32, #tpu.memory_space<vmem>>, %arg4: memref<1x12xf32, #tpu.memory_space<vmem>>, %arg5: memref<32x12xf32, #tpu.memory_space<vmem>>, %arg6: memref<12x128xf32, #tpu.memory_space<vmem>>, %arg7: memref<1x128xf32, #tpu.memory_space<vmem>>, %arg8: memref<2x128xf32, #tpu.memory_space<vmem>>) attributes {dimension_semantics = [], scalar_prefetch = 0 : i64, scratch_operands = 0 : i64, tpu.core_type = #tpu.core_type<tc>} {
    %c0 = arith.constant 0 : index
    %c0_0 = arith.constant 0 : index
    %0 = vector.load %arg0[%c0, %c0_0] : memref<36x1xi32, #tpu.memory_space<vmem>>, vector<36x1xi32>
    %1 = tpu.iota {dimensions = array<i32: 1>} : vector<36x50xi32>
    %2 = vector.broadcast %0 : vector<36x1xi32> to vector<36x50xi32>
    %3 = arith.cmpi eq, %2, %1 : vector<36x50xi32>
    %4 = arith.extui %3 : vector<36x50xi1> to vector<36x50xi32>
    %5 = arith.sitofp %4 : vector<36x50xi32> to vector<36x50xf32>
    %c0_1 = arith.constant 0 : index
    %c0_2 = arith.constant 0 : index
    %6 = vector.load %arg1[%c0_1, %c0_2] : memref<50x32xf32, #tpu.memory_space<vmem>>, vector<50x32xf32>
    %cst = arith.constant dense<0.000000e+00> : vector<36x32xf32>
    %7 = tpu.matmul %5, %6, %cst {dimension_numbers = #tpu.dot_dimension_numbers<[1], [0], [0], [1], [0, 0, 1, 1], [], []>} : vector<36x50xf32>, vector<50x32xf32>, vector<36x32xf32> -> vector<36x32xf32>
    %8 = vector.extract_strided_slice %7 {offsets = [0, 0], sizes = [32, 32], strides = [1, 1]} : vector<36x32xf32> to vector<32x32xf32>
    %c0_3 = arith.constant 0 : index
    %c0_4 = arith.constant 0 : index
    %c0_5 = arith.constant 0 : index
    %9 = vector.load %arg2[%c0_3, %c0_4, %c0_5] : memref<5x32x12xf32, #tpu.memory_space<vmem>>, vector<1x32x12xf32>
    %10 = vector.shape_cast %9 : vector<1x32x12xf32> to vector<32x12xf32>
    %cst_6 = arith.constant dense<0.000000e+00> : vector<32x12xf32>
    %11 = tpu.matmul %8, %10, %cst_6 {dimension_numbers = #tpu.dot_dimension_numbers<[1], [0], [0], [1], [0, 0, 1, 1], [], []>} : vector<32x32xf32>, vector<32x12xf32>, vector<32x12xf32> -> vector<32x12xf32>
    %12 = vector.extract_strided_slice %7 {offsets = [1, 0], sizes = [32, 32], strides = [1, 1]} : vector<36x32xf32> to vector<32x32xf32>
    %c1 = arith.constant 1 : index
    %c0_7 = arith.constant 0 : index
    %c0_8 = arith.constant 0 : index
    %13 = vector.load %arg2[%c1, %c0_7, %c0_8] : memref<5x32x12xf32, #tpu.memory_space<vmem>>, vector<1x32x12xf32>
    %14 = vector.shape_cast %13 : vector<1x32x12xf32> to vector<32x12xf32>
    %cst_9 = arith.constant dense<0.000000e+00> : vector<32x12xf32>
    %15 = tpu.matmul %12, %14, %cst_9 {dimension_numbers = #tpu.dot_dimension_numbers<[1], [0], [0], [1], [0, 0, 1, 1], [], []>} : vector<32x32xf32>, vector<32x12xf32>, vector<32x12xf32> -> vector<32x12xf32>
    %16 = arith.addf %11, %15 : vector<32x12xf32>
    %17 = vector.extract_strided_slice %7 {offsets = [2, 0], sizes = [32, 32], strides = [1, 1]} : vector<36x32xf32> to vector<32x32xf32>
    %c2 = arith.constant 2 : index
    %c0_10 = arith.constant 0 : index
    %c0_11 = arith.constant 0 : index
    %18 = vector.load %arg2[%c2, %c0_10, %c0_11] : memref<5x32x12xf32, #tpu.memory_space<vmem>>, vector<1x32x12xf32>
    %19 = vector.shape_cast %18 : vector<1x32x12xf32> to vector<32x12xf32>
    %cst_12 = arith.constant dense<0.000000e+00> : vector<32x12xf32>
    %20 = tpu.matmul %17, %19, %cst_12 {dimension_numbers = #tpu.dot_dimension_numbers<[1], [0], [0], [1], [0, 0, 1, 1], [], []>} : vector<32x32xf32>, vector<32x12xf32>, vector<32x12xf32> -> vector<32x12xf32>
    %21 = arith.addf %16, %20 : vector<32x12xf32>
    %22 = vector.extract_strided_slice %7 {offsets = [3, 0], sizes = [32, 32], strides = [1, 1]} : vector<36x32xf32> to vector<32x32xf32>
    %c3 = arith.constant 3 : index
    %c0_13 = arith.constant 0 : index
    %c0_14 = arith.constant 0 : index
    %23 = vector.load %arg2[%c3, %c0_13, %c0_14] : memref<5x32x12xf32, #tpu.memory_space<vmem>>, vector<1x32x12xf32>
    %24 = vector.shape_cast %23 : vector<1x32x12xf32> to vector<32x12xf32>
    %cst_15 = arith.constant dense<0.000000e+00> : vector<32x12xf32>
    %25 = tpu.matmul %22, %24, %cst_15 {dimension_numbers = #tpu.dot_dimension_numbers<[1], [0], [0], [1], [0, 0, 1, 1], [], []>} : vector<32x32xf32>, vector<32x12xf32>, vector<32x12xf32> -> vector<32x12xf32>
    %26 = arith.addf %21, %25 : vector<32x12xf32>
    %27 = vector.extract_strided_slice %7 {offsets = [4, 0], sizes = [32, 32], strides = [1, 1]} : vector<36x32xf32> to vector<32x32xf32>
    %c4 = arith.constant 4 : index
    %c0_16 = arith.constant 0 : index
    %c0_17 = arith.constant 0 : index
    %28 = vector.load %arg2[%c4, %c0_16, %c0_17] : memref<5x32x12xf32, #tpu.memory_space<vmem>>, vector<1x32x12xf32>
    %29 = vector.shape_cast %28 : vector<1x32x12xf32> to vector<32x12xf32>
    %cst_18 = arith.constant dense<0.000000e+00> : vector<32x12xf32>
    %30 = tpu.matmul %27, %29, %cst_18 {dimension_numbers = #tpu.dot_dimension_numbers<[1], [0], [0], [1], [0, 0, 1, 1], [], []>} : vector<32x32xf32>, vector<32x12xf32>, vector<32x12xf32> -> vector<32x12xf32>
    %31 = arith.addf %26, %30 : vector<32x12xf32>
    %c0_19 = arith.constant 0 : index
    %c0_20 = arith.constant 0 : index
    %32 = vector.load %arg3[%c0_19, %c0_20] : memref<1x12xf32, #tpu.memory_space<vmem>>, vector<1x12xf32>
    %33 = vector.broadcast %32 : vector<1x12xf32> to vector<32x12xf32>
    %34 = arith.mulf %31, %33 : vector<32x12xf32>
    %c0_21 = arith.constant 0 : index
    %c0_22 = arith.constant 0 : index
    %35 = vector.load %arg4[%c0_21, %c0_22] : memref<1x12xf32, #tpu.memory_space<vmem>>, vector<1x12xf32>
    %36 = vector.broadcast %35 : vector<1x12xf32> to vector<32x12xf32>
    %37 = arith.addf %34, %36 : vector<32x12xf32>
    %cst_23 = arith.constant 0.000000e+00 : f32
    %38 = vector.broadcast %cst_23 : f32 to vector<32x12xf32>
    %39 = arith.maximumf %37, %38 : vector<32x12xf32>
    %c0_24 = arith.constant 0 : index
    %c0_25 = arith.constant 0 : index
    %40 = vector.load %arg5[%c0_24, %c0_25] : memref<32x12xf32, #tpu.memory_space<vmem>>, vector<32x12xf32>
    %41 = arith.mulf %39, %40 : vector<32x12xf32>
    %42 = vector.extract_strided_slice %41 {offsets = [0, 0], sizes = [16, 12], strides = [1, 1]} : vector<32x12xf32> to vector<16x12xf32>
    %cst_26 = arith.constant dense<0xFF800000> : vector<12xf32>
    %43 = vector.multi_reduction <maximumf>, %42, %cst_26 [0] : vector<16x12xf32> to vector<12xf32>
    %44 = vector.shape_cast %43 : vector<12xf32> to vector<1x12xf32>
    %45 = vector.extract_strided_slice %41 {offsets = [16, 0], sizes = [16, 12], strides = [1, 1]} : vector<32x12xf32> to vector<16x12xf32>
    %cst_27 = arith.constant dense<0xFF800000> : vector<12xf32>
    %46 = vector.multi_reduction <maximumf>, %45, %cst_27 [0] : vector<16x12xf32> to vector<12xf32>
    %47 = vector.shape_cast %46 : vector<12xf32> to vector<1x12xf32>
    %48 = tpu.concatenate %44, %47 in 0 : vector<1x12xf32>, vector<1x12xf32> -> vector<2x12xf32>
    %c0_28 = arith.constant 0 : index
    %c0_29 = arith.constant 0 : index
    %49 = vector.load %arg6[%c0_28, %c0_29] : memref<12x128xf32, #tpu.memory_space<vmem>>, vector<12x128xf32>
    %cst_30 = arith.constant dense<0.000000e+00> : vector<2x128xf32>
    %50 = tpu.matmul %48, %49, %cst_30 {dimension_numbers = #tpu.dot_dimension_numbers<[1], [0], [0], [1], [0, 0, 1, 1], [], []>} : vector<2x12xf32>, vector<12x128xf32>, vector<2x128xf32> -> vector<2x128xf32>
    %c0_31 = arith.constant 0 : index
    %c0_32 = arith.constant 0 : index
    %51 = vector.load %arg7[%c0_31, %c0_32] : memref<1x128xf32, #tpu.memory_space<vmem>>, vector<1x128xf32>
    %52 = vector.broadcast %51 : vector<1x128xf32> to vector<2x128xf32>
    %53 = arith.addf %50, %52 : vector<2x128xf32>
    %54 = vector.extract_strided_slice %53 {offsets = [0, 0], sizes = [2, 20], strides = [1, 1]} : vector<2x128xf32> to vector<2x20xf32>
    %55 = vector.extract_strided_slice %53 {offsets = [0, 20], sizes = [2, 20], strides = [1, 1]} : vector<2x128xf32> to vector<2x20xf32>
    %56 = arith.maximumf %54, %55 : vector<2x20xf32>
    %57 = arith.subf %54, %56 : vector<2x20xf32>
    %58 = math.exp %57 : vector<2x20xf32>
    %59 = arith.subf %55, %56 : vector<2x20xf32>
    %60 = math.exp %59 : vector<2x20xf32>
    %61 = arith.addf %58, %60 : vector<2x20xf32>
    %62 = math.log %61 : vector<2x20xf32>
    %63 = arith.addf %56, %62 : vector<2x20xf32>
    %64 = arith.subf %54, %63 : vector<2x20xf32>
    %65 = arith.subf %55, %63 : vector<2x20xf32>
    %cst_33 = arith.constant 0.000000e+00 : f32
    %66 = vector.broadcast %cst_33 : f32 to vector<2x88xf32>
    %67 = tpu.concatenate %64, %65, %66 in 1 : vector<2x20xf32>, vector<2x20xf32>, vector<2x88xf32> -> vector<2x128xf32>
    %c0_34 = arith.constant 0 : index
    %c0_35 = arith.constant 0 : index
    %68 = vector.load %arg8[%c0_34, %c0_35] : memref<2x128xf32, #tpu.memory_space<vmem>>, vector<2x128xf32>
    tpu.vector_store %arg8[%c0_34, %c0_35], %67 {strides = array<i32>} : memref<2x128xf32, #tpu.memory_space<vmem>>, vector<2x128xf32>,
    return
  }
}

</mosaic_0001>

<llo_original>
// kernel: tpu_custom_call.1
$region0: #{tpu_custom_call.1}
  #allocation0 [shape = 'u32[]', space=smem, size = 0x4, offset = 0x4, fixed_abs, tag = 'smem constant byte address 0x4 - core index']
  #allocation1 [shape = 'u32[144,128]{1,0:T(1,128)}', space=vmem, size = 0x12000, scoped, tag = 'internal scratch']
  %s0 = inlined_call_operand.vmem [shape: s32[36,1], index: 0, kind: input, shape index: {}]
  %s1 = inlined_call_operand.vmem [shape: f32[50,32], index: 1, kind: input, shape index: {}]
  %s2 = inlined_call_operand.vmem [shape: f32[5,32,12], index: 2, kind: input, shape index: {}]
  %s3 = inlined_call_operand.vmem [shape: f32[1,12], index: 3, kind: input, shape index: {}]
  %s4 = inlined_call_operand.vmem [shape: f32[1,12], index: 4, kind: input, shape index: {}]
  %s5 = inlined_call_operand.vmem [shape: f32[32,12], index: 5, kind: input, shape index: {}]
  %s6 = inlined_call_operand.vmem [shape: f32[12,128], index: 6, kind: input, shape index: {}]
  %s7 = inlined_call_operand.vmem [shape: f32[1,128], index: 7, kind: input, shape index: {}]
  %s8 = inlined_call_operand.hbm [shape: f32[2,128], index: 8, kind: output, shape index: {}]
  %s9 = sld [smem:[#allocation0]]
  $region42: #{tpu_custom_call.1} parent=0
    _
  %s11 = ssub.s32 1, %s9
  %s12 = scalar_select 0, %s11, %s9
  $region1: #{tpu_custom_call.1} parent=0
    #allocation2 [shape = 'u8[1024]{0}', space=vmem, size = 0x400, scoped, tag = 'output window, operand 0, single buffered']
    #allocation3 [shape = 's32[1]{0}', space=sflag, size = 0x4, scoped, tag = 'scoped memory for tpu_custom_call.1']
    %13 = vsyncpa [#allocation3], 0
    // Predicated region
    $region2: #{tpu_custom_call.1} parent=1 // pred_check
      _
    $region3: #{tpu_custom_call.1} parent=1 // pred_check_branch
      %15 = sbr.rel (0) target = $region5
    $region4: #{tpu_custom_call.1} parent=1 // pred_region
      _
    $region5: #{tpu_custom_call.1} parent=1 // pred_fallthru
      _
    // Predicated region
    $region6: #{tpu_custom_call.1} parent=1 // pred_check
      _
    $region7: #{tpu_custom_call.1} parent=1 // pred_check_branch
      %17 = sbr.rel (0) target = $region9
    $region8: #{tpu_custom_call.1} parent=1 // pred_region
      _
    $region9: #{tpu_custom_call.1} parent=1 // pred_fallthru
      _
    // Predicated region
    $region10: #{tpu_custom_call.1} parent=1 // pred_check
      _
    $region11: #{tpu_custom_call.1} parent=1 // pred_check_branch
      %19 = sbr.rel (0) target = $region13
    $region12: #{tpu_custom_call.1} parent=1 // pred_region
      _
    $region13: #{tpu_custom_call.1} parent=1 // pred_fallthru
      _
    // Predicated region
    $region14: #{tpu_custom_call.1} parent=1 // pred_check
      _
    $region15: #{tpu_custom_call.1} parent=1 // pred_check_branch
      %21 = sbr.rel (0) target = $region17
    $region16: #{tpu_custom_call.1} parent=1 // pred_region
      _
    $region17: #{tpu_custom_call.1} parent=1 // pred_fallthru
      _
    // Predicated region
    $region18: #{tpu_custom_call.1} parent=1 // pred_check
      _
    $region19: #{tpu_custom_call.1} parent=1 // pred_check_branch
      %23 = sbr.rel (0) target = $region21
    $region20: #{tpu_custom_call.1} parent=1 // pred_region
      _
    $region21: #{tpu_custom_call.1} parent=1 // pred_fallthru
      _
    // Predicated region
    $region22: #{tpu_custom_call.1} parent=1 // pred_check
      _
    $region23: #{tpu_custom_call.1} parent=1 // pred_check_branch
      %25 = sbr.rel (0) target = $region25
    $region24: #{tpu_custom_call.1} parent=1 // pred_region
      _
    $region25: #{tpu_custom_call.1} parent=1 // pred_fallthru
      _
    // Predicated region
    $region26: #{tpu_custom_call.1} parent=1 // pred_check
      _
    $region27: #{tpu_custom_call.1} parent=1 // pred_check_branch
      %27 = sbr.rel (0) target = $region29
    $region28: #{tpu_custom_call.1} parent=1 // pred_region
      _
    $region29: #{tpu_custom_call.1} parent=1 // pred_fallthru
      _
    // Predicated region
    $region30: #{tpu_custom_call.1} parent=1 // pred_check
      _
    $region31: #{tpu_custom_call.1} parent=1 // pred_check_branch
      %29 = sbr.rel (0) target = $region33
    $region32: #{tpu_custom_call.1} parent=1 // pred_region
      _
    $region33: #{tpu_custom_call.1} parent=1 // pred_fallthru
      _
    %v30 = vld [vmem:[%s0] sm:$0xff]
    %v31 = vld [vmem:[%s0 + $0x8] sm:$0xff]
    %v32 = vld [vmem:[%s0 + $0x10] sm:$0xff]
    %v33 = vld [vmem:[%s0 + $0x18] sm:$0xff]
    %v34 = vld [vmem:[%s0 + $0x20] sm:$0xf]
    %v35 = vlaneseq
    %v36 = vand.u32 %v35, 127
    %37 = vset.pattern.permute.xlu0 0
    %38 = vperm.xlu0 %37, %v30
    %v39 = vpop.permute.xlu0 %38
    %40 = vset.pattern.permute.xlu0 0
    %41 = vperm.xlu0 %40, %v31
    %v42 = vpop.permute.xlu0 %41
    %43 = vset.pattern.permute.xlu0 0
    %44 = vperm.xlu0 %43, %v32
    %v45 = vpop.permute.xlu0 %44
    %46 = vset.pattern.permute.xlu0 0
    %47 = vperm.xlu0 %46, %v33
    %v48 = vpop.permute.xlu0 %47
    %49 = vset.pattern.permute.xlu0 0
    %50 = vperm.xlu0 %49, %v34
    %v51 = vpop.permute.xlu0 %50
    %vm52 = vcmp.eq.s32.totalorder %v39, %v36
    %vm53 = vcmp.eq.s32.totalorder %v42, %v36
    %vm54 = vcmp.eq.s32.totalorder %v45, %v36
    %vm55 = vcmp.eq.s32.totalorder %v48, %v36
    %vm56 = vcmp.eq.s32.totalorder %v51, %v36
    %v57 = vsel %vm52, 1, 0
    %v58 = vsel %vm53, 1, 0
    %v59 = vsel %vm54, 1, 0
    %v60 = vsel %vm55, 1, 0
    %v61 = vsel %vm56, 1, 0
    %v62 = vcvt.s32.f32 %v57
    %v63 = vcvt.s32.f32 %v58
    %v64 = vcvt.s32.f32 %v59
    %v65 = vcvt.s32.f32 %v60
    %v66 = vcvt.s32.f32 %v61
    %v67 = vld [vmem:[%s1] sm:$0xff]
    %v68 = vld [vmem:[%s1 + $0x8] sm:$0xff]
    %v69 = vld [vmem:[%s1 + $0x10] sm:$0xff]
    %v70 = vld [vmem:[%s1 + $0x18] sm:$0xff]
    %v71 = vld [vmem:[%s1 + $0x20] sm:$0xff]
    %v72 = vld [vmem:[%s1 + $0x28] sm:$0xff]
    %v73 = vld [vmem:[%s1 + $0x30] sm:$0x3]
    %vm74 = vcmask 408576
    %v76 = vsel %vm74, %v62, 0
    %v79 = vsel %vm74, %v63, 0
    %v82 = vsel %vm74, %v64, 0
    %v85 = vsel %vm74, %v65, 0
    %v88 = vsel %vm74, %v66, 0
    %vm90 = vcmask 1041408
    %v92 = vsel %vm90, %v73, 0
    %94 = vmatprep.subr.mxu0 0.0
    %95 = vmatpush1.msra.mxu0 %v67
    %96 = vmatprep.subr.mxu0 0.0
    %97 = vmatpush1.msra.mxu0 %v68
    %98 = vmatprep.subr.mxu0 0.0
    %99 = vmatpush1.msra.mxu0 %v69
    %100 = vmatprep.subr.mxu0 0.0
    %101 = vmatpush1.msra.mxu0 %v70
    %102 = vmatprep.subr.mxu0 0.0
    %103 = vmatpush1.msra.mxu0 %v71
    %104 = vmatprep.subr.mxu0 0.0
    %105 = vmatpush1.msra.mxu0 %v72
    %106 = vmatprep.subr.mxu0 0.0
    %107 = vmatpush1.msra.mxu0 %v92
    %108 = vmatprep.subr.mxu0 0.0
    %109 = vmatpush1.msra.mxu0 0.0
    %110 = vmatprep.subr.mxu0 0.0
    %111 = vmatpush1.msra.mxu0 0.0
    %112 = vmatprep.subr.mxu0 0.0
    %113 = vmatpush1.msra.mxu0 0.0
    %114 = vmatprep.subr.mxu0 0.0
    %115 = vmatpush1.msra.mxu0 0.0
    %116 = vmatprep.subr.mxu0 0.0
    %117 = vmatpush1.msra.mxu0 0.0
    %118 = vmatprep.subr.mxu0 0.0
    %119 = vmatpush1.msra.mxu0 0.0
    %120 = vmatprep.subr.mxu0 0.0
    %121 = vmatpush1.msra.mxu0 0.0
    %122 = vmatprep.subr.mxu0 0.0
    %123 = vmatpush1.msra.mxu0 0.0
    %124 = vmatprep.subr.mxu0 0.0
    %125 = vmatpush1.msra.mxu0 0.0
    %126 = vmatprep.subr.mxu0 0.0
    %127 = vmatpush1.msra.mxu0 0.0
    %128 = vmatprep.subr.mxu0 0.0
    %129 = vmatpush1.msra.mxu0 0.0
    %130 = vmatprep.subr.mxu0 0.0
    %131 = vmatpush1.msra.mxu0 0.0
    %132 = vmatprep.subr.mxu0 0.0
    %133 = vmatpush1.msra.mxu0 0.0
    %134 = vmatprep.subr.mxu0 0.0
    %135 = vmatpush1.msra.mxu0 0.0
    %136 = vmatprep.subr.mxu0 0.0
    %137 = vmatpush1.msra.mxu0 0.0
    %138 = vmatprep.subr.mxu0 0.0
    %139 = vmatpush1.msra.mxu0 0.0
    %140 = vmatprep.subr.mxu0 0.0
    %141 = vmatpush1.msra.mxu0 0.0
    %142 = vmatprep.subr.mxu0 0.0
    %143 = vmatpush1.msra.mxu0 0.0
    %144 = vmatprep.subr.mxu0 0.0
    %145 = vmatpush1.msra.mxu0 0.0
    %146 = vmatprep.subr.mxu0 0.0
    %147 = vmatpush1.msra.mxu0 0.0
    %148 = vmatprep.subr.mxu0 0.0
    %149 = vmatpush1.msra.mxu0 0.0
    %150 = vmatprep.subr.mxu0 0.0
    %151 = vmatpush1.msra.mxu0 0.0
    %152 = vmatprep.subr.mxu0 0.0
    %153 = vmatpush1.msra.mxu0 0.0
    %154 = vmatprep.subr.mxu0 0.0
    %155 = vmatpush1.msra.mxu0 0.0
    %156 = vmatprep.subr.mxu0 0.0
    %157 = vmatpush1.msra.mxu0 0.0
    %158 = vmatprep.mubr.f32.mxu0 0.0
    %159 = vmatmul.mubr.f32.gmra.mrb[0].mxu0 %v76
    %v160 = vpop.f32.mrb[0].mxu0
    %v161 = vadd.f32 0.0, %v160
    %v162 = vpop.f32.mrb[0].mxu0
    %163 = vmatprep.mubr.f32.mxu0 0.0
    %164 = vmatmul.mubr.f32.gmra.mrb[0].mxu0 %v79
    %v165 = vpop.f32.mrb[0].mxu0
    %v166 = vadd.f32 0.0, %v165
    %v167 = vpop.f32.mrb[0].mxu0
    %168 = vmatprep.mubr.f32.mxu0 0.0
    %169 = vmatmul.mubr.f32.gmra.mrb[0].mxu0 %v82
    %v170 = vpop.f32.mrb[0].mxu0
    %v171 = vadd.f32 0.0, %v170
    %v172 = vpop.f32.mrb[0].mxu0
    %173 = vmatprep.mubr.f32.mxu0 0.0
    %174 = vmatmul.mubr.f32.gmra.mrb[0].mxu0 %v85
    %v175 = vpop.f32.mrb[0].mxu0
    %v176 = vadd.f32 0.0, %v175
    %v177 = vpop.f32.mrb[0].mxu0
    %178 = vmatprep.mubr.f32.mxu0 0.0
    %179 = vmatmul.mubr.f32.gmra.mrb[0].mxu0 %v88
    %v180 = vpop.f32.mrb[0].mxu0
    %v181 = vadd.f32 0.0, %v180
    %v182 = vpop.f32.mrb[0].mxu0
    %183 = vdwg.mxu0
    %v184 = vld [vmem:[%s2] sm:$0xff]
    %v185 = vld [vmem:[%s2 + $0x8] sm:$0xff]
    %v186 = vld [vmem:[%s2 + $0x10] sm:$0xff]
    %v187 = vld [vmem:[%s2 + $0x18] sm:$0xff]
    %s188 = scalar_lea.vmem %s2, 32
    %v189 = vld [vmem:[%s188] sm:$0xff]
    %v190 = vld [vmem:[%s188 + $0x8] sm:$0xff]
    %v191 = vld [vmem:[%s188 + $0x10] sm:$0xff]
    %v192 = vld [vmem:[%s188 + $0x18] sm:$0xff]
    %vm198 = vcmask 1046528
    %v199 = vrot.slane %v161, 1
    %v200 = vrot.slane %v166, 1
    %v201 = vsel %vm198, %v199, %v200
    %v202 = vrot.slane %v171, 1
    %v203 = vsel %vm198, %v200, %v202
    %v204 = vrot.slane %v176, 1
    %v205 = vsel %vm198, %v202, %v204
    %v206 = vrot.slane %v181, 1
    %v207 = vsel %vm198, %v204, %v206
    %vm208 = vcmask 261120
    %v209 = vsel %vm208, %v201, 0
    %v211 = vsel %vm208, %v203, 0
    %v213 = vsel %vm208, %v205, 0
    %v215 = vsel %vm208, %v207, 0
    %217 = vmatprep.subr.mxu0 0.0
    %218 = vmatpush1.msra.mxu0 %v189
    %219 = vmatprep.subr.mxu0 0.0
    %220 = vmatpush1.msra.mxu0 %v190
    %221 = vmatprep.subr.mxu0 0.0
    %222 = vmatpush1.msra.mxu0 %v191
    %223 = vmatprep.subr.mxu0 0.0
    %224 = vmatpush1.msra.mxu0 %v192
    %225 = vmatprep.subr.mxu0 0.0
    %226 = vmatpush1.msra.mxu0 0.0
    %227 = vmatprep.subr.mxu0 0.0
    %228 = vmatpush1.msra.mxu0 0.0
    %229 = vmatprep.subr.mxu0 0.0
    %230 = vmatpush1.msra.mxu0 0.0
    %231 = vmatprep.subr.mxu0 0.0
    %232 = vmatpush1.msra.mxu0 0.0
    %233 = vmatprep.subr.mxu0 0.0
    %234 = vmatpush1.msra.mxu0 0.0
    %235 = vmatprep.subr.mxu0 0.0
    %236 = vmatpush1.msra.mxu0 0.0
    %237 = vmatprep.subr.mxu0 0.0
    %238 = vmatpush1.msra.mxu0 0.0
    %239 = vmatprep.subr.mxu0 0.0
    %240 = vmatpush1.msra.mxu0 0.0
    %241 = vmatprep.subr.mxu0 0.0
    %242 = vmatpush1.msra.mxu0 0.0
    %243 = vmatprep.subr.mxu0 0.0
    %244 = vmatpush1.msra.mxu0 0.0
    %245 = vmatprep.subr.mxu0 0.0
    %246 = vmatpush1.msra.mxu0 0.0
    %247 = vmatprep.subr.mxu0 0.0
    %248 = vmatpush1.msra.mxu0 0.0
    %249 = vmatprep.subr.mxu0 0.0
    %250 = vmatpush1.msra.mxu0 0.0
    %251 = vmatprep.subr.mxu0 0.0
    %252 = vmatpush1.msra.mxu0 0.0
    %253 = vmatprep.subr.mxu0 0.0
    %254 = vmatpush1.msra.mxu0 0.0
    %255 = vmatprep.subr.mxu0 0.0
    %256 = vmatpush1.msra.mxu0 0.0
    %257 = vmatprep.subr.mxu0 0.0
    %258 = vmatpush1.msra.mxu0 0.0
    %259 = vmatprep.subr.mxu0 0.0
    %260 = vmatpush1.msra.mxu0 0.0
    %261 = vmatprep.subr.mxu0 0.0
    %262 = vmatpush1.msra.mxu0 0.0
    %263 = vmatprep.subr.mxu0 0.0
    %264 = vmatpush1.msra.mxu0 0.0
    %265 = vmatprep.subr.mxu0 0.0
    %266 = vmatpush1.msra.mxu0 0.0
    %267 = vmatprep.subr.mxu0 0.0
    %268 = vmatpush1.msra.mxu0 0.0
    %269 = vmatprep.subr.mxu0 0.0
    %270 = vmatpush1.msra.mxu0 0.0
    %271 = vmatprep.subr.mxu0 0.0
    %272 = vmatpush1.msra.mxu0 0.0
    %273 = vmatprep.subr.mxu0 0.0
    %274 = vmatpush1.msra.mxu0 0.0
    %275 = vmatprep.subr.mxu0 0.0
    %276 = vmatpush1.msra.mxu0 0.0
    %277 = vmatprep.subr.mxu0 0.0
    %278 = vmatpush1.msra.mxu0 0.0
    %279 = vmatprep.subr.mxu0 0.0
    %280 = vmatpush1.msra.mxu0 0.0
    %281 = vmatprep.mubr.f32.mxu0 0.0
    %282 = vmatmul.mubr.f32.gmra.mrb[0].mxu0 %v209
    %v283 = vpop.f32.mrb[0].mxu0
    %v284 = vadd.f32 0.0, %v283
    %v285 = vpop.f32.mrb[0].mxu0
    %286 = vmatprep.mubr.f32.mxu0 0.0
    %287 = vmatmul.mubr.f32.gmra.mrb[0].mxu0 %v211
    %v288 = vpop.f32.mrb[0].mxu0
    %v289 = vadd.f32 0.0, %v288
    %v290 = vpop.f32.mrb[0].mxu0
    %291 = vmatprep.mubr.f32.mxu0 0.0
    %292 = vmatmul.mubr.f32.gmra.mrb[0].mxu0 %v213
    %v293 = vpop.f32.mrb[0].mxu0
    %v294 = vadd.f32 0.0, %v293
    %v295 = vpop.f32.mrb[0].mxu0
    %296 = vmatprep.mubr.f32.mxu0 0.0
    %297 = vmatmul.mubr.f32.gmra.mrb[0].mxu0 %v215
    %v298 = vpop.f32.mrb[0].mxu0
    %v299 = vadd.f32 0.0, %v298
    %v300 = vpop.f32.mrb[0].mxu0
    %301 = vdwg.mxu0
    %v302 = vsel %vm208, %v161, 0
    %v304 = vsel %vm208, %v166, 0
    %v306 = vsel %vm208, %v171, 0
    %v308 = vsel %vm208, %v176, 0
    %310 = vmatprep.subr.mxu0 0.0
    %311 = vmatpush1.msra.mxu0 %v184
    %312 = vmatprep.subr.mxu0 0.0
    %313 = vmatpush1.msra.mxu0 %v185
    %314 = vmatprep.subr.mxu0 0.0
    %315 = vmatpush1.msra.mxu0 %v186
    %316 = vmatprep.subr.mxu0 0.0
    %317 = vmatpush1.msra.mxu0 %v187
    %318 = vmatprep.subr.mxu0 0.0
    %319 = vmatpush1.msra.mxu0 0.0
    %320 = vmatprep.subr.mxu0 0.0
    %321 = vmatpush1.msra.mxu0 0.0
    %322 = vmatprep.subr.mxu0 0.0
    %323 = vmatpush1.msra.mxu0 0.0
    %324 = vmatprep.subr.mxu0 0.0
    %325 = vmatpush1.msra.mxu0 0.0
    %326 = vmatprep.subr.mxu0 0.0
    %327 = vmatpush1.msra.mxu0 0.0
    %328 = vmatprep.subr.mxu0 0.0
    %329 = vmatpush1.msra.mxu0 0.0
    %330 = vmatprep.subr.mxu0 0.0
    %331 = vmatpush1.msra.mxu0 0.0
    %332 = vmatprep.subr.mxu0 0.0
    %333 = vmatpush1.msra.mxu0 0.0
    %334 = vmatprep.subr.mxu0 0.0
    %335 = vmatpush1.msra.mxu0 0.0
    %336 = vmatprep.subr.mxu0 0.0
    %337 = vmatpush1.msra.mxu0 0.0
    %338 = vmatprep.subr.mxu0 0.0
    %339 = vmatpush1.msra.mxu0 0.0
    %340 = vmatprep.subr.mxu0 0.0
    %341 = vmatpush1.msra.mxu0 0.0
    %342 = vmatprep.subr.mxu0 0.0
    %343 = vmatpush1.msra.mxu0 0.0
    %344 = vmatprep.subr.mxu0 0.0
    %345 = vmatpush1.msra.mxu0 0.0
    %346 = vmatprep.subr.mxu0 0.0
    %347 = vmatpush1.msra.mxu0 0.0
    %348 = vmatprep.subr.mxu0 0.0
    %349 = vmatpush1.msra.mxu0 0.0
    %350 = vmatprep.subr.mxu0 0.0
    %351 = vmatpush1.msra.mxu0 0.0
    %352 = vmatprep.subr.mxu0 0.0
    %353 = vmatpush1.msra.mxu0 0.0
    %354 = vmatprep.subr.mxu0 0.0
    %355 = vmatpush1.msra.mxu0 0.0
    %356 = vmatprep.subr.mxu0 0.0
    %357 = vmatpush1.msra.mxu0 0.0
    %358 = vmatprep.subr.mxu0 0.0
    %359 = vmatpush1.msra.mxu0 0.0
    %360 = vmatprep.subr.mxu0 0.0
    %361 = vmatpush1.msra.mxu0 0.0
    %362 = vmatprep.subr.mxu0 0.0
    %363 = vmatpush1.msra.mxu0 0.0
    %364 = vmatprep.subr.mxu0 0.0
    %365 = vmatpush1.msra.mxu0 0.0
    %366 = vmatprep.subr.mxu0 0.0
    %367 = vmatpush1.msra.mxu0 0.0
    %368 = vmatprep.subr.mxu0 0.0
    %369 = vmatpush1.msra.mxu0 0.0
    %370 = vmatprep.subr.mxu0 0.0
    %371 = vmatpush1.msra.mxu0 0.0
    %372 = vmatprep.subr.mxu0 0.0
    %373 = vmatpush1.msra.mxu0 0.0
    %374 = vmatprep.mubr.f32.mxu0 0.0
    %375 = vmatmul.mubr.f32.gmra.mrb[0].mxu0 %v302
    %v376 = vpop.f32.mrb[0].mxu0
    %v377 = vadd.f32 %v284, %v376
    %v378 = vpop.f32.mrb[0].mxu0
    %379 = vmatprep.mubr.f32.mxu0 0.0
    %380 = vmatmul.mubr.f32.gmra.mrb[0].mxu0 %v304
    %v381 = vpop.f32.mrb[0].mxu0
    %v382 = vadd.f32 %v289, %v381
    %v383 = vpop.f32.mrb[0].mxu0
    %384 = vmatprep.mubr.f32.mxu0 0.0
    %385 = vmatmul.mubr.f32.gmra.mrb[0].mxu0 %v306
    %v386 = vpop.f32.mrb[0].mxu0
    %v387 = vadd.f32 %v294, %v386
    %v388 = vpop.f32.mrb[0].mxu0
    %389 = vmatprep.mubr.f32.mxu0 0.0
    %390 = vmatmul.mubr.f32.gmra.mrb[0].mxu0 %v308
    %v391 = vpop.f32.mrb[0].mxu0
    %v392 = vadd.f32 %v299, %v391
    %v393 = vpop.f32.mrb[0].mxu0
    %394 = vdwg.mxu0
    %s395 = scalar_lea.vmem %s2, 64
    %v396 = vld [vmem:[%s395] sm:$0xff]
    %v397 = vld [vmem:[%s395 + $0x8] sm:$0xff]
    %v398 = vld [vmem:[%s395 + $0x10] sm:$0xff]
    %v399 = vld [vmem:[%s395 + $0x18] sm:$0xff]
    %vm400 = vcmask 1045504
    %v401 = vrot.slane %v161, 2
    %v402 = vrot.slane %v166, 2
    %v403 = vsel %vm400, %v401, %v402
    %v404 = vrot.slane %v171, 2
    %v405 = vsel %vm400, %v402, %v404
    %v406 = vrot.slane %v176, 2
    %v407 = vsel %vm400, %v404, %v406
    %v408 = vrot.slane %v181, 2
    %v409 = vsel %vm400, %v406, %v408
    %v410 = vsel %vm208, %v403, 0
    %v412 = vsel %vm208, %v405, 0
    %v414 = vsel %vm208, %v407, 0
    %v416 = vsel %vm208, %v409, 0
    %418 = vmatprep.subr.mxu0 0.0
    %419 = vmatpush1.msra.mxu0 %v396
    %420 = vmatprep.subr.mxu0 0.0
    %421 = vmatpush1.msra.mxu0 %v397
    %422 = vmatprep.subr.mxu0 0.0
    %423 = vmatpush1.msra.mxu0 %v398
    %424 = vmatprep.subr.mxu0 0.0
    %425 = vmatpush1.msra.mxu0 %v399
    %426 = vmatprep.subr.mxu0 0.0
    %427 = vmatpush1.msra.mxu0 0.0
    %428 = vmatprep.subr.mxu0 0.0
    %429 = vmatpush1.msra.mxu0 0.0
    %430 = vmatprep.subr.mxu0 0.0
    %431 = vmatpush1.msra.mxu0 0.0
    %432 = vmatprep.subr.mxu0 0.0
    %433 = vmatpush1.msra.mxu0 0.0
    %434 = vmatprep.subr.mxu0 0.0
    %435 = vmatpush1.msra.mxu0 0.0
    %436 = vmatprep.subr.mxu0 0.0
    %437 = vmatpush1.msra.mxu0 0.0
    %438 = vmatprep.subr.mxu0 0.0
    %439 = vmatpush1.msra.mxu0 0.0
    %440 = vmatprep.subr.mxu0 0.0
    %441 = vmatpush1.msra.mxu0 0.0
    %442 = vmatprep.subr.mxu0 0.0
    %443 = vmatpush1.msra.mxu0 0.0
    %444 = vmatprep.subr.mxu0 0.0
    %445 = vmatpush1.msra.mxu0 0.0
    %446 = vmatprep.subr.mxu0 0.0
    %447 = vmatpush1.msra.mxu0 0.0
    %448 = vmatprep.subr.mxu0 0.0
    %449 = vmatpush1.msra.mxu0 0.0
    %450 = vmatprep.subr.mxu0 0.0
    %451 = vmatpush1.msra.mxu0 0.0
    %452 = vmatprep.subr.mxu0 0.0
    %453 = vmatpush1.msra.mxu0 0.0
    %454 = vmatprep.subr.mxu0 0.0
    %455 = vmatpush1.msra.mxu0 0.0
    %456 = vmatprep.subr.mxu0 0.0
    %457 = vmatpush1.msra.mxu0 0.0
    %458 = vmatprep.subr.mxu0 0.0
    %459 = vmatpush1.msra.mxu0 0.0
    %460 = vmatprep.subr.mxu0 0.0
    %461 = vmatpush1.msra.mxu0 0.0
    %462 = vmatprep.subr.mxu0 0.0
    %463 = vmatpush1.msra.mxu0 0.0
    %464 = vmatprep.subr.mxu0 0.0
    %465 = vmatpush1.msra.mxu0 0.0
    %466 = vmatprep.subr.mxu0 0.0
    %467 = vmatpush1.msra.mxu0 0.0
    %468 = vmatprep.subr.mxu0 0.0
    %469 = vmatpush1.msra.mxu0 0.0
    %470 = vmatprep.subr.mxu0 0.0
    %471 = vmatpush1.msra.mxu0 0.0
    %472 = vmatprep.subr.mxu0 0.0
    %473 = vmatpush1.msra.mxu0 0.0
    %474 = vmatprep.subr.mxu0 0.0
    %475 = vmatpush1.msra.mxu0 0.0
    %476 = vmatprep.subr.mxu0 0.0
    %477 = vmatpush1.msra.mxu0 0.0
    %478 = vmatprep.subr.mxu0 0.0
    %479 = vmatpush1.msra.mxu0 0.0
    %480 = vmatprep.subr.mxu0 0.0
    %481 = vmatpush1.msra.mxu0 0.0
    %482 = vmatprep.mubr.f32.mxu0 0.0
    %483 = vmatmul.mubr.f32.gmra.mrb[0].mxu0 %v410
    %v484 = vpop.f32.mrb[0].mxu0
    %v485 = vadd.f32 0.0, %v484
    %v486 = vpop.f32.mrb[0].mxu0
    %487 = vmatprep.mubr.f32.mxu0 0.0
    %488 = vmatmul.mubr.f32.gmra.mrb[0].mxu0 %v412
    %v489 = vpop.f32.mrb[0].mxu0
    %v490 = vadd.f32 0.0, %v489
    %v491 = vpop.f32.mrb[0].mxu0
    %492 = vmatprep.mubr.f32.mxu0 0.0
    %493 = vmatmul.mubr.f32.gmra.mrb[0].mxu0 %v414
    %v494 = vpop.f32.mrb[0].mxu0
    %v495 = vadd.f32 0.0, %v494
    %v496 = vpop.f32.mrb[0].mxu0
    %497 = vmatprep.mubr.f32.mxu0 0.0
    %498 = vmatmul.mubr.f32.gmra.mrb[0].mxu0 %v416
    %v499 = vpop.f32.mrb[0].mxu0
    %v500 = vadd.f32 0.0, %v499
    %v501 = vpop.f32.mrb[0].mxu0
    %502 = vdwg.mxu0
    %v503 = vadd.f32 %v377, %v485
    %v504 = vadd.f32 %v382, %v490
    %v505 = vadd.f32 %v387, %v495
    %v506 = vadd.f32 %v392, %v500
    %s507 = scalar_lea.vmem %s2, 96
    %v508 = vld [vmem:[%s507] sm:$0xff]
    %v509 = vld [vmem:[%s507 + $0x8] sm:$0xff]
    %v510 = vld [vmem:[%s507 + $0x10] sm:$0xff]
    %v511 = vld [vmem:[%s507 + $0x18] sm:$0xff]
    %vm512 = vcmask 1044480
    %v513 = vrot.slane %v161, 3
    %v514 = vrot.slane %v166, 3
    %v515 = vsel %vm512, %v513, %v514
    %v516 = vrot.slane %v171, 3
    %v517 = vsel %vm512, %v514, %v516
    %v518 = vrot.slane %v176, 3
    %v519 = vsel %vm512, %v516, %v518
    %v520 = vrot.slane %v181, 3
    %v521 = vsel %vm512, %v518, %v520
    %v522 = vsel %vm208, %v515, 0
    %v524 = vsel %vm208, %v517, 0
    %v526 = vsel %vm208, %v519, 0
    %v528 = vsel %vm208, %v521, 0
    %530 = vmatprep.subr.mxu0 0.0
    %531 = vmatpush1.msra.mxu0 %v508
    %532 = vmatprep.subr.mxu0 0.0
    %533 = vmatpush1.msra.mxu0 %v509
    %534 = vmatprep.subr.mxu0 0.0
    %535 = vmatpush1.msra.mxu0 %v510
    %536 = vmatprep.subr.mxu0 0.0
    %537 = vmatpush1.msra.mxu0 %v511
    %538 = vmatprep.subr.mxu0 0.0
    %539 = vmatpush1.msra.mxu0 0.0
    %540 = vmatprep.subr.mxu0 0.0
    %541 = vmatpush1.msra.mxu0 0.0
    %542 = vmatprep.subr.mxu0 0.0
    %543 = vmatpush1.msra.mxu0 0.0
    %544 = vmatprep.subr.mxu0 0.0
    %545 = vmatpush1.msra.mxu0 0.0
    %546 = vmatprep.subr.mxu0 0.0
    %547 = vmatpush1.msra.mxu0 0.0
    %548 = vmatprep.subr.mxu0 0.0
    %549 = vmatpush1.msra.mxu0 0.0
    %550 = vmatprep.subr.mxu0 0.0
    %551 = vmatpush1.msra.mxu0 0.0
    %552 = vmatprep.subr.mxu0 0.0
    %553 = vmatpush1.msra.mxu0 0.0
    %554 = vmatprep.subr.mxu0 0.0
    %555 = vmatpush1.msra.mxu0 0.0
    %556 = vmatprep.subr.mxu0 0.0
    %557 = vmatpush1.msra.mxu0 0.0
    %558 = vmatprep.subr.mxu0 0.0
    %559 = vmatpush1.msra.mxu0 0.0
    %560 = vmatprep.subr.mxu0 0.0
    %561 = vmatpush1.msra.mxu0 0.0
    %562 = vmatprep.subr.mxu0 0.0
    %563 = vmatpush1.msra.mxu0 0.0
    %564 = vmatprep.subr.mxu0 0.0
    %565 = vmatpush1.msra.mxu0 0.0
    %566 = vmatprep.subr.mxu0 0.0
    %567 = vmatpush1.msra.mxu0 0.0
    %568 = vmatprep.subr.mxu0 0.0
    %569 = vmatpush1.msra.mxu0 0.0
    %570 = vmatprep.subr.mxu0 0.0
    %571 = vmatpush1.msra.mxu0 0.0
    %572 = vmatprep.subr.mxu0 0.0
    %573 = vmatpush1.msra.mxu0 0.0
    %574 = vmatprep.subr.mxu0 0.0
    %575 = vmatpush1.msra.mxu0 0.0
    %576 = vmatprep.subr.mxu0 0.0
    %577 = vmatpush1.msra.mxu0 0.0
    %578 = vmatprep.subr.mxu0 0.0
    %579 = vmatpush1.msra.mxu0 0.0
    %580 = vmatprep.subr.mxu0 0.0
    %581 = vmatpush1.msra.mxu0 0.0
    %582 = vmatprep.subr.mxu0 0.0
    %583 = vmatpush1.msra.mxu0 0.0
    %584 = vmatprep.subr.mxu0 0.0
    %585 = vmatpush1.msra.mxu0 0.0
    %586 = vmatprep.subr.mxu0 0.0
    %587 = vmatpush1.msra.mxu0 0.0
    %588 = vmatprep.subr.mxu0 0.0
    %589 = vmatpush1.msra.mxu0 0.0
    %590 = vmatprep.subr.mxu0 0.0
    %591 = vmatpush1.msra.mxu0 0.0
    %592 = vmatprep.subr.mxu0 0.0
    %593 = vmatpush1.msra.mxu0 0.0
    %594 = vmatprep.mubr.f32.mxu0 0.0
    %595 = vmatmul.mubr.f32.gmra.mrb[0].mxu0 %v522
    %v596 = vpop.f32.mrb[0].mxu0
    %v597 = vadd.f32 0.0, %v596
    %v598 = vpop.f32.mrb[0].mxu0
    %599 = vmatprep.mubr.f32.mxu0 0.0
    %600 = vmatmul.mubr.f32.gmra.mrb[0].mxu0 %v524
    %v601 = vpop.f32.mrb[0].mxu0
    %v602 = vadd.f32 0.0, %v601
    %v603 = vpop.f32.mrb[0].mxu0
    %604 = vmatprep.mubr.f32.mxu0 0.0
    %605 = vmatmul.mubr.f32.gmra.mrb[0].mxu0 %v526
    %v606 = vpop.f32.mrb[0].mxu0
    %v607 = vadd.f32 0.0, %v606
    %v608 = vpop.f32.mrb[0].mxu0
    %609 = vmatprep.mubr.f32.mxu0 0.0
    %610 = vmatmul.mubr.f32.gmra.mrb[0].mxu0 %v528
    %v611 = vpop.f32.mrb[0].mxu0
    %v612 = vadd.f32 0.0, %v611
    %v613 = vpop.f32.mrb[0].mxu0
    %614 = vdwg.mxu0
    %v615 = vadd.f32 %v503, %v597
    %v616 = vadd.f32 %v504, %v602
    %v617 = vadd.f32 %v505, %v607
    %v618 = vadd.f32 %v506, %v612
    %s619 = scalar_lea.vmem %s2, 128
    %v620 = vld [vmem:[%s619] sm:$0xff]
    %v621 = vld [vmem:[%s619 + $0x8] sm:$0xff]
    %v622 = vld [vmem:[%s619 + $0x10] sm:$0xff]
    %v623 = vld [vmem:[%s619 + $0x18] sm:$0xff]
    %vm624 = vcmask 1043456
    %v625 = vrot.slane %v161, 4
    %v626 = vrot.slane %v166, 4
    %v627 = vsel %vm624, %v625, %v626
    %v628 = vrot.slane %v171, 4
    %v629 = vsel %vm624, %v626, %v628
    %v630 = vrot.slane %v176, 4
    %v631 = vsel %vm624, %v628, %v630
    %v632 = vrot.slane %v181, 4
    %v633 = vsel %vm624, %v630, %v632
    %v634 = vsel %vm208, %v627, 0
    %v636 = vsel %vm208, %v629, 0
    %v638 = vsel %vm208, %v631, 0
    %v640 = vsel %vm208, %v633, 0
    %642 = vmatprep.subr.mxu0 0.0
    %643 = vmatpush1.msra.mxu0 %v620
    %644 = vmatprep.subr.mxu0 0.0
    %645 = vmatpush1.msra.mxu0 %v621
    %646 = vmatprep.subr.mxu0 0.0
    %647 = vmatpush1.msra.mxu0 %v622
    %648 = vmatprep.subr.mxu0 0.0
    %649 = vmatpush1.msra.mxu0 %v623
    %650 = vmatprep.subr.mxu0 0.0
    %651 = vmatpush1.msra.mxu0 0.0
    %652 = vmatprep.subr.mxu0 0.0
    %653 = vmatpush1.msra.mxu0 0.0
    %654 = vmatprep.subr.mxu0 0.0
    %655 = vmatpush1.msra.mxu0 0.0
    %656 = vmatprep.subr.mxu0 0.0
    %657 = vmatpush1.msra.mxu0 0.0
    %658 = vmatprep.subr.mxu0 0.0
    %659 = vmatpush1.msra.mxu0 0.0
    %660 = vmatprep.subr.mxu0 0.0
    %661 = vmatpush1.msra.mxu0 0.0
    %662 = vmatprep.subr.mxu0 0.0
    %663 = vmatpush1.msra.mxu0 0.0
    %664 = vmatprep.subr.mxu0 0.0
    %665 = vmatpush1.msra.mxu0 0.0
    %666 = vmatprep.subr.mxu0 0.0
    %667 = vmatpush1.msra.mxu0 0.0
    %668 = vmatprep.subr.mxu0 0.0
    %669 = vmatpush1.msra.mxu0 0.0
    %670 = vmatprep.subr.mxu0 0.0
    %671 = vmatpush1.msra.mxu0 0.0
    %672 = vmatprep.subr.mxu0 0.0
    %673 = vmatpush1.msra.mxu0 0.0
    %674 = vmatprep.subr.mxu0 0.0
    %675 = vmatpush1.msra.mxu0 0.0
    %676 = vmatprep.subr.mxu0 0.0
    %677 = vmatpush1.msra.mxu0 0.0
    %678 = vmatprep.subr.mxu0 0.0
    %679 = vmatpush1.msra.mxu0 0.0
    %680 = vmatprep.subr.mxu0 0.0
    %681 = vmatpush1.msra.mxu0 0.0
    %682 = vmatprep.subr.mxu0 0.0
    %683 = vmatpush1.msra.mxu0 0.0
    %684 = vmatprep.subr.mxu0 0.0
    %685 = vmatpush1.msra.mxu0 0.0
    %686 = vmatprep.subr.mxu0 0.0
    %687 = vmatpush1.msra.mxu0 0.0
    %688 = vmatprep.subr.mxu0 0.0
    %689 = vmatpush1.msra.mxu0 0.0
    %690 = vmatprep.subr.mxu0 0.0
    %691 = vmatpush1.msra.mxu0 0.0
    %692 = vmatprep.subr.mxu0 0.0
    %693 = vmatpush1.msra.mxu0 0.0
    %694 = vmatprep.subr.mxu0 0.0
    %695 = vmatpush1.msra.mxu0 0.0
    %696 = vmatprep.subr.mxu0 0.0
    %697 = vmatpush1.msra.mxu0 0.0
    %698 = vmatprep.subr.mxu0 0.0
    %699 = vmatpush1.msra.mxu0 0.0
    %700 = vmatprep.subr.mxu0 0.0
    %701 = vmatpush1.msra.mxu0 0.0
    %702 = vmatprep.subr.mxu0 0.0
    %703 = vmatpush1.msra.mxu0 0.0
    %704 = vmatprep.subr.mxu0 0.0
    %705 = vmatpush1.msra.mxu0 0.0
    %706 = vmatprep.mubr.f32.mxu0 0.0
    %707 = vmatmul.mubr.f32.gmra.mrb[0].mxu0 %v634
    %v708 = vpop.f32.mrb[0].mxu0
    %v709 = vadd.f32 0.0, %v708
    %v710 = vpop.f32.mrb[0].mxu0
    %711 = vmatprep.mubr.f32.mxu0 0.0
    %712 = vmatmul.mubr.f32.gmra.mrb[0].mxu0 %v636
    %v713 = vpop.f32.mrb[0].mxu0
    %v714 = vadd.f32 0.0, %v713
    %v715 = vpop.f32.mrb[0].mxu0
    %716 = vmatprep.mubr.f32.mxu0 0.0
    %717 = vmatmul.mubr.f32.gmra.mrb[0].mxu0 %v638
    %v718 = vpop.f32.mrb[0].mxu0
    %v719 = vadd.f32 0.0, %v718
    %v720 = vpop.f32.mrb[0].mxu0
    %721 = vmatprep.mubr.f32.mxu0 0.0
    %722 = vmatmul.mubr.f32.gmra.mrb[0].mxu0 %v640
    %v723 = vpop.f32.mrb[0].mxu0
    %v724 = vadd.f32 0.0, %v723
    %v725 = vpop.f32.mrb[0].mxu0
    %726 = vdwg.mxu0
    %v727 = vadd.f32 %v615, %v709
    %v728 = vadd.f32 %v616, %v714
    %v729 = vadd.f32 %v617, %v719
    %v730 = vadd.f32 %v618, %v724
    %v731 = vld [vmem:[%s3] sm:$0x1]
    %v733 = vlaneseq
    %v734 = vshrl.u32 %v733, 7
    %v735 = vsub.s32 0, %v734
    %v736 = vrot.slane %v731, %v735
    %v738 = vmul.f32 %v727, %v736
    %v739 = vmul.f32 %v728, %v736
    %v740 = vmul.f32 %v729, %v736
    %v741 = vmul.f32 %v730, %v736
    %v742 = vld [vmem:[%s4] sm:$0x1]
    %v744 = vlaneseq
    %v745 = vshrl.u32 %v744, 7
    %v746 = vsub.s32 0, %v745
    %v747 = vrot.slane %v742, %v746
    %v749 = vadd.f32 %v738, %v747
    %v750 = vadd.f32 %v739, %v747
    %v751 = vadd.f32 %v740, %v747
    %v752 = vadd.f32 %v741, %v747
    %v753 = vmax.f32 %v749, 0.0
    %v754 = vmax.f32 %v750, 0.0
    %v755 = vmax.f32 %v751, 0.0
    %v756 = vmax.f32 %v752, 0.0
    %v757 = vld [vmem:[%s5] sm:$0xff]
    %v758 = vld [vmem:[%s5 + $0x8] sm:$0xff]
    %v759 = vld [vmem:[%s5 + $0x10] sm:$0xff]
    %v760 = vld [vmem:[%s5 + $0x18] sm:$0xff]
    %v761 = vmul.f32 %v753, %v757
    %v762 = vmul.f32 %v754, %v758
    %v763 = vmul.f32 %v755, %v759
    %v764 = vmul.f32 %v756, %v760
    %vm765 = vcmask 97280
    %v766 = vsel %vm765, %v761, -inf
    %v767 = vsel %vm765, %v762, -inf
    %v768 = vmax.f32 %v766, %v767
    %v769 = vrot.slane %v768, 4
    %v770 = vmax.f32 %v768, %v769
    %v771 = vrot.slane %v770, 2
    %v772 = vmax.f32 %v770, %v771
    %v773 = vrot.slane %v772, 1
    %v774 = vmax.f32 %v772, %v773
    %v775 = vsel %vm765, %v763, -inf
    %v776 = vsel %vm765, %v764, -inf
    %v777 = vmax.f32 %v775, %v776
    %v778 = vrot.slane %v777, 4
    %v779 = vmax.f32 %v777, %v778
    %v780 = vrot.slane %v779, 2
    %v781 = vmax.f32 %v779, %v780
    %v782 = vrot.slane %v781, 1
    %v783 = vmax.f32 %v781, %v782
    %vm784 = vcmask 1040384
    %v785 = vsel %vm784, %v774, %v783
    %v786 = vld [vmem:[%s6] sm:$0xff]
    %v787 = vld [vmem:[%s6 + $0x8] sm:$0xf]
    %v788 = vld [vmem:[%s7] sm:$0x1]
    %v790 = vlaneseq
    %v791 = vshrl.u32 %v790, 7
    %v792 = vsub.s32 0, %v791
    %v793 = vrot.slane %v788, %v792
    %v796 = vsel %vm765, %v785, 0
    %v799 = vsel %vm624, %v787, 0
    %801 = vmatprep.subr.mxu0 0.0
    %802 = vmatpush1.msra.mxu0 %v786
    %803 = vmatprep.subr.mxu0 0.0
    %804 = vmatpush1.msra.mxu0 %v799
    %805 = vmatprep.subr.mxu0 0.0
    %806 = vmatpush1.msra.mxu0 0.0
    %807 = vmatprep.subr.mxu0 0.0
    %808 = vmatpush1.msra.mxu0 0.0
    %809 = vmatprep.subr.mxu0 0.0
    %810 = vmatpush1.msra.mxu0 0.0
    %811 = vmatprep.subr.mxu0 0.0
    %812 = vmatpush1.msra.mxu0 0.0
    %813 = vmatprep.subr.mxu0 0.0
    %814 = vmatpush1.msra.mxu0 0.0
    %815 = vmatprep.subr.mxu0 0.0
    %816 = vmatpush1.msra.mxu0 0.0
    %817 = vmatprep.subr.mxu0 0.0
    %818 = vmatpush1.msra.mxu0 0.0
    %819 = vmatprep.subr.mxu0 0.0
    %820 = vmatpush1.msra.mxu0 0.0
    %821 = vmatprep.subr.mxu0 0.0
    %822 = vmatpush1.msra.mxu0 0.0
    %823 = vmatprep.subr.mxu0 0.0
    %824 = vmatpush1.msra.mxu0 0.0
    %825 = vmatprep.subr.mxu0 0.0
    %826 = vmatpush1.msra.mxu0 0.0
    %827 = vmatprep.subr.mxu0 0.0
    %828 = vmatpush1.msra.mxu0 0.0
    %829 = vmatprep.subr.mxu0 0.0
    %830 = vmatpush1.msra.mxu0 0.0
    %831 = vmatprep.subr.mxu0 0.0
    %832 = vmatpush1.msra.mxu0 0.0
    %833 = vmatprep.subr.mxu0 0.0
    %834 = vmatpush1.msra.mxu0 0.0
    %835 = vmatprep.subr.mxu0 0.0
    %836 = vmatpush1.msra.mxu0 0.0
    %837 = vmatprep.subr.mxu0 0.0
    %838 = vmatpush1.msra.mxu0 0.0
    %839 = vmatprep.subr.mxu0 0.0
    %840 = vmatpush1.msra.mxu0 0.0
    %841 = vmatprep.subr.mxu0 0.0
    %842 = vmatpush1.msra.mxu0 0.0
    %843 = vmatprep.subr.mxu0 0.0
    %844 = vmatpush1.msra.mxu0 0.0
    %845 = vmatprep.subr.mxu0 0.0
    %846 = vmatpush1.msra.mxu0 0.0
    %847 = vmatprep.subr.mxu0 0.0
    %848 = vmatpush1.msra.mxu0 0.0
    %849 = vmatprep.subr.mxu0 0.0
    %850 = vmatpush1.msra.mxu0 0.0
    %851 = vmatprep.subr.mxu0 0.0
    %852 = vmatpush1.msra.mxu0 0.0
    %853 = vmatprep.subr.mxu0 0.0
    %854 = vmatpush1.msra.mxu0 0.0
    %855 = vmatprep.subr.mxu0 0.0
    %856 = vmatpush1.msra.mxu0 0.0
    %857 = vmatprep.subr.mxu0 0.0
    %858 = vmatpush1.msra.mxu0 0.0
    %859 = vmatprep.subr.mxu0 0.0
    %860 = vmatpush1.msra.mxu0 0.0
    %861 = vmatprep.subr.mxu0 0.0
    %862 = vmatpush1.msra.mxu0 0.0
    %863 = vmatprep.subr.mxu0 0.0
    %864 = vmatpush1.msra.mxu0 0.0
    %865 = vmatprep.mubr.f32.mxu0 0.0
    %866 = vmatmul.mubr.f32.gmra.mrb[0].mxu0 %v796
    %v867 = vpop.f32.mrb[0].mxu0
    %v868 = vadd.f32 %v793, %v867
    %v869 = vpop.f32.mrb[0].mxu0
    %870 = vdwg.mxu0
    %872 = vrot.lane.b32.xlu0 %v868, 108
    %v873 = vpop.permute.xlu0 %872
    %v875 = vmax.f32 %v868, %v873
    %v876 = vsub.f32 %v868, %v875
    %v877 = vmul.f32 %v876, 1.442695
    %v878 = vpow.pop %v877
    %880 = vrot.lane.b32.xlu0 %v875, 20
    %v881 = vpop.permute.xlu0 %880
    %v883 = vsub.f32 %v868, %v881
    %v884 = vmul.f32 %v883, 1.442695
    %v885 = vpow.pop %v884
    %887 = vrot.lane.b32.xlu0 %v885, 108
    %v888 = vpop.permute.xlu0 %887
    %v890 = vadd.f32 %v878, %v888
    %v891 = vlog2.pop %v890
    %v892 = vmul.f32 %v891, 0.6931472
    %v893 = vadd.f32 %v875, %v892
    %v894 = vsub.f32 %v868, %v893
    %896 = vrot.lane.b32.xlu0 %v893, 20
    %v897 = vpop.permute.xlu0 %896
    %v899 = vsub.f32 %v868, %v897
    %vm900 = vcmask 162816
    %v901 = vsel %vm900, %v894, %v899
    %vm902 = vcmask 326656
    %v903 = vsel %vm902, %v901, 0.0
    %904 = vst [vmem:[#allocation2] sm:$0x3] %v903
    // Predicated region
    $region34: #{tpu_custom_call.1} parent=1 // pred_check
      _
    $region35: #{tpu_custom_call.1} parent=1 // pred_check_branch
      %906 = sbr.rel (0) target = $region37
    $region36: #{tpu_custom_call.1} parent=1 // pred_region
      %s908 = ssub.s32 32, 32
      %909 = vsyncadd [#allocation3], %s908
      %s911 = sshll.u32 [#allocation2], 4
      %s912 = int_to_ptr.vmem [resolvable:$true] %s911
      %914 = dma.vmem_to_hbm [thread:$0]  %s912, 32, %s8, [#allocation3]
    $region37: #{tpu_custom_call.1} parent=1 // pred_fallthru
      _
    // Predicated region
    $region38: #{tpu_custom_call.1} parent=1 // pred_check
      _
    $region39: #{tpu_custom_call.1} parent=1 // pred_check_branch
      %916 = sbr.rel (0) target = $region41
    $region40: #{tpu_custom_call.1} parent=1 // pred_region
      %917 = dma.done [#allocation3], 32
    $region41: #{tpu_custom_call.1} parent=1 // pred_fallthru
      _
    %918 = vsyncpa [#allocation3], 1

</llo_original>
